<compile_context>
chip_gen: v6e
topology: v6e:2x2x1
jax: 0.10.0
libtpu: 0.0.40
codegen_flags: <defaults>
</compile_context>

<pallas_src>
import functools

import jax
import jax.numpy as jnp
from jax.experimental import pallas as pl
from jax.experimental.pallas import tpu as pltpu

GIN_EPS = 0.0            # GINConv default eps
BN_EPS = 1e-5            # BatchNorm1d default eps


def _round_up(v, m):
    return (v + m - 1) // m * m


def _vmem_limit_bytes():
    """Generation-aware scoped-VMEM budget (falls back when not on a TPU)."""
    try:
        cap = int(pltpu.get_tpu_info().vmem_capacity_bytes)
    except Exception:
        cap = 64 * 1024 * 1024          # conservative: v7x per-TC VMEM
    return max(32 * 1024 * 1024, min(100 * 1024 * 1024, (cap * 3) // 4))


# --------------------------------------------------------------------------
# Pass 1: GIN aggregation (A @ x accumulated over K blocks) + MLP, emitting
# pre-BN activations (bf16) and per-row-block partial BatchNorm statistics.
# --------------------------------------------------------------------------
def _gin_pass1_kernel(adj_ref, x_ref, w1_ref, b1_ref, w2_ref,
                      h2_ref, stats_ref, acc_ref, *, n_real, tm):
    # Read grid position at kernel top level; the pl.when bodies close over
    # these values (program_id inside a pl.when body breaks interpret lowering).
    i = pl.program_id(0)
    k = pl.program_id(1)
    k_last = pl.num_programs(1) - 1

    @pl.when(k == 0)
    def _init():
        acc_ref[...] = jnp.zeros_like(acc_ref)

    # GIN aggregation: accumulate this K block of A @ x.  Adjacency is int8 in
    # HBM (dominant stream of a mem-bound pass); upcast is VPU filler.
    adj = adj_ref[...].astype(jnp.bfloat16)
    acc_ref[...] += jnp.dot(adj, x_ref[...], preferred_element_type=jnp.float32)

    @pl.when(k == k_last)
    def _finalize():
        # GIN MLP: Linear -> ReLU -> Linear (b2 omitted: cancelled by BN mean).
        h = acc_ref[...].astype(jnp.bfloat16)
        h1 = jnp.dot(h, w1_ref[...],
                     preferred_element_type=jnp.float32) + b1_ref[...]
        h1 = jnp.maximum(h1, 0.0).astype(jnp.bfloat16)
        h2 = jnp.dot(h1, w2_ref[...], preferred_element_type=jnp.float32)
        h2_ref[...] = h2.astype(h2_ref.dtype)          # bf16 HBM round-trip

        # Partial BN stats for this row block (f32), masking padded node rows.
        row = i * tm + jax.lax.broadcasted_iota(jnp.int32, h2.shape, 0)
        h2m = jnp.where(row < n_real, h2, 0.0)
        stats_ref[0:1, :] = jnp.sum(h2m, axis=0, keepdims=True)
        stats_ref[1:2, :] = jnp.sum(h2m * h2m, axis=0, keepdims=True)
        # Rows 2..7 of the (8, C) stats block are never read; left unwritten.


# --------------------------------------------------------------------------
# Pass 2: finalize BatchNorm (scale/shift from reduced stats) + ReLU.
# --------------------------------------------------------------------------
def _bn_relu_kernel(h2_ref, ssum_ref, ssq_ref, gamma_ref, beta_ref, o_ref,
                    *, inv_n, bn_eps):
    mean = ssum_ref[...] * inv_n                       # (1, C)
    var = ssq_ref[...] * inv_n - mean * mean           # biased variance
    scale = gamma_ref[...] * jax.lax.rsqrt(var + bn_eps)
    shift = beta_ref[...] - mean * scale
    h2 = h2_ref[...].astype(jnp.float32)
    o_ref[...] = jnp.maximum(h2 * scale + shift, 0.0).astype(o_ref.dtype)


def graph_gin_bn(x, edge_index, params, *, tm=None, tk=None):
    """x: (N, C_in) f32, edge_index: (2, E) int32 (row 0 = src, row 1 = dst)."""
    n, c_in = x.shape
    w1, b1, w2, b2, gamma, beta = params
    del b2  # exactly cancelled by the BatchNorm mean subtraction
    c_out = w1.shape[1]

    c_out_p = _round_up(c_out, 128)          # lane-dense output columns
    vmem_limit = _vmem_limit_bytes()

    # ---- tile selection ----
    if tm is None:
        tm = min(1024, _round_up(n, 32))     # int8 adjacency sublane tile = 32
        if n > 32:                           # keep >=2 row blocks (v7x 2 TCs)
            tm = min(tm, max(32, _round_up((n + 1) // 2, 32)))
    tm = _round_up(tm, 32)
    if tk is None:
        tk = min(4096, _round_up(n, 128))
    tk = _round_up(tk, 128)

    def pass1_bytes(tm_, tk_):
        return (2 * tm_ * tk_                                   # adj int8 x2
                + 2 * tk_ * c_in * 2                            # x bf16 x2
                + 2 * (c_in + c_out_p) * c_out_p * 2            # W1/W2 bf16 x2
                + 2 * c_out_p * 4                               # b1
                + 2 * tm_ * c_out_p * 2                         # h2 out bf16 x2
                + 2 * 8 * c_out_p * 4                           # stats out x2
                + tm_ * c_in * 4)                               # acc scratch

    # Shrink tiles until the double-buffered working set fits the VMEM budget.
    while pass1_bytes(tm, tk) > vmem_limit - (4 << 20) and (tk > 128 or tm > 32):
        if tk > 128:
            tk = max(128, tk // 2)
        else:
            tm = max(32, tm // 2)

    n_pad_r = _round_up(n, tm)
    n_pad_k = _round_up(n, tk)
    g_rows = n_pad_r // tm
    g_k = n_pad_k // tk

    # ---- glue: densify edge list into int8 counts, fold the GIN self term ----
    # TODO(synk): for large sparse graphs replace the dense-adjacency matmul
    # with a CSR / scalar-prefetch gather formulation (PrefetchScalarGridSpec).
    assert float(GIN_EPS).is_integer(), "int8 adjacency requires integer 1+eps"
    src, dst = edge_index[0], edge_index[1]
    diag = jnp.arange(n)
    adj = (jnp.zeros((n_pad_r, n_pad_k), jnp.int32)
           .at[dst, src].add(1)
           .at[diag, diag].add(1 + int(GIN_EPS)))
    adj = adj.astype(jnp.int8)   # exact for <=127 parallel edges per (dst,src)

    xp = jnp.zeros((n_pad_k, c_in), jnp.bfloat16).at[:n, :].set(
        x.astype(jnp.bfloat16))
    w1p = jnp.zeros((c_in, c_out_p), jnp.bfloat16).at[:, :c_out].set(
        w1.astype(jnp.bfloat16))
    b1p = jnp.zeros((1, c_out_p), jnp.float32).at[:, :c_out].set(b1)
    w2p = jnp.zeros((c_out_p, c_out_p), jnp.bfloat16).at[:c_out, :c_out].set(
        w2.astype(jnp.bfloat16))
    gammap = jnp.zeros((1, c_out_p), jnp.float32).at[:, :c_out].set(gamma)
    betap = jnp.zeros((1, c_out_p), jnp.float32).at[:, :c_out].set(beta)

    # ---- pass 1: aggregation + MLP + partial BN stats ----
    kernel1 = functools.partial(_gin_pass1_kernel, n_real=n, tm=tm)
    h2, stats = pl.pallas_call(
        kernel1,
        grid=(g_rows, g_k),
        in_specs=[
            pl.BlockSpec((tm, tk), lambda i, k: (i, k)),            # adjacency
            pl.BlockSpec((tk, c_in), lambda i, k: (k, 0)),          # x
            pl.BlockSpec((c_in, c_out_p), lambda i, k: (0, 0)),     # W1
            pl.BlockSpec((1, c_out_p), lambda i, k: (0, 0)),        # b1
            pl.BlockSpec((c_out_p, c_out_p), lambda i, k: (0, 0)),  # W2
        ],
        out_specs=(
            pl.BlockSpec((tm, c_out_p), lambda i, k: (i, 0)),       # h2 (pre-BN)
            pl.BlockSpec((8, c_out_p), lambda i, k: (i, 0)),        # partial stats
        ),
        out_shape=(
            jax.ShapeDtypeStruct((n_pad_r, c_out_p), jnp.bfloat16),
            jax.ShapeDtypeStruct((g_rows * 8, c_out_p), jnp.float32),
        ),
        scratch_shapes=[pltpu.VMEM((tm, c_in), jnp.float32)],
        compiler_params=pltpu.CompilerParams(
            dimension_semantics=("parallel", "arbitrary"),
            vmem_limit_bytes=vmem_limit),
    )(adj, xp, w1p, b1p, w2p)

    # Tiny glue reduction of the per-row-block partial statistics.
    stats = stats.reshape(g_rows, 8, c_out_p)
    ssum = jnp.sum(stats[:, 0, :], axis=0, keepdims=True)   # (1, C)
    ssq = jnp.sum(stats[:, 1, :], axis=0, keepdims=True)    # (1, C)

    # ---- pass 2: BatchNorm finalize + ReLU (large mem-bound row blocks) ----
    tm2 = tm
    for d in range(g_rows, 0, -1):
        if g_rows % d == 0 and tm * d <= 2048:
            tm2 = tm * d
            break
    g2 = n_pad_r // tm2

    kernel2 = functools.partial(_bn_relu_kernel, inv_n=1.0 / n, bn_eps=BN_EPS)
    y = pl.pallas_call(
        kernel2,
        grid=(g2,),
        in_specs=[
            pl.BlockSpec((tm2, c_out_p), lambda i: (i, 0)),  # h2 (bf16)
            pl.BlockSpec((1, c_out_p), lambda i: (0, 0)),    # sum
            pl.BlockSpec((1, c_out_p), lambda i: (0, 0)),    # sum of squares
            pl.BlockSpec((1, c_out_p), lambda i: (0, 0)),    # gamma
            pl.BlockSpec((1, c_out_p), lambda i: (0, 0)),    # beta
        ],
        out_specs=pl.BlockSpec((tm2, c_out_p), lambda i: (i, 0)),
        out_shape=jax.ShapeDtypeStruct((n_pad_r, c_out_p), jnp.float32),
        compiler_params=pltpu.CompilerParams(
            dimension_semantics=("parallel",),
            vmem_limit_bytes=vmem_limit),
    )(h2, ssum, ssq, gammap, betap)

    return y[:n, :c_out]


def init_params(key, in_channels, out_channels):
    """Deterministic synthetic parameters matching the module's shapes."""
    k1, k2, k3, k4 = jax.random.split(key, 4)
    # nn.Linear(in, out): torch weight is (out, in); we store the transpose.
    w1 = jax.random.normal(k1, (in_channels, out_channels), jnp.float32) * 0.1
    b1 = jax.random.normal(k2, (1, out_channels), jnp.float32) * 0.1
    w2 = jax.random.normal(k3, (out_channels, out_channels), jnp.float32) * 0.1
    b2 = jax.random.normal(k4, (1, out_channels), jnp.float32) * 0.1
    gamma = jnp.ones((1, out_channels), jnp.float32)   # BatchNorm1d weight
    beta = jnp.zeros((1, out_channels), jnp.float32)   # BatchNorm1d bias
    return (w1, b1, w2, b2, gamma, beta)


if __name__ == "__main__":
    N_NODES = 200          # deliberately not a multiple of the row tile
    IN_CHANNELS = 8
    OUT_CHANNELS = 32
    N_EDGES = 600

    key = jax.random.PRNGKey(0)
    kx, ke, kp = jax.random.split(key, 3)

    x = jax.random.normal(kx, (N_NODES, IN_CHANNELS), jnp.float32)
    edge_index = jax.random.randint(ke, (2, N_EDGES), 0, N_NODES, jnp.int32)
    batch = jnp.zeros((N_NODES,), jnp.int32)  # carried by `data`, unused in compute

    params = init_params(kp, IN_CHANNELS, OUT_CHANNELS)

    # tm=64 / tk=128 exercise multiple row blocks, multiple K blocks, and the
    # padded-row masking path (200 nodes -> 256-row padded buffers).
    out = graph_gin_bn(x, edge_index, params, tm=64, tk=128)
    out = jax.block_until_ready(out)

    # ------------------------- reference checks -------------------------
    w1, b1, w2, b2, gamma, beta = params
    diag = jnp.arange(N_NODES)
    adj_f32 = (jnp.zeros((N_NODES, N_NODES), jnp.float32)
               .at[edge_index[1], edge_index[0]].add(1.0)
               .at[diag, diag].add(1.0 + GIN_EPS))

    # (a) arithmetic-matched reference: bf16 MXU inputs, f32 stats, bf16 h2
    #     storage before the BN affine; b2 dropped (exact: cancelled by BN).
    bf = jnp.bfloat16
    aggr = jnp.dot(adj_f32.astype(bf), x.astype(bf),
                   preferred_element_type=jnp.float32)
    h1 = jnp.maximum(jnp.dot(aggr.astype(bf), w1.astype(bf),
                             preferred_element_type=jnp.float32) + b1, 0.0)
    h2_m = jnp.dot(h1.astype(bf), w2.astype(bf),
                   preferred_element_type=jnp.float32)
    mu_m = h2_m.mean(axis=0, keepdims=True)
    var_m = (h2_m * h2_m).mean(axis=0, keepdims=True) - mu_m * mu_m
    scale_m = gamma * jax.lax.rsqrt(var_m + BN_EPS)
    shift_m = beta - mu_m * scale_m
    ref_matched = jnp.maximum(
        h2_m.astype(bf).astype(jnp.float32) * scale_m + shift_m, 0.0)
    assert jnp.allclose(out, ref_matched, atol=3e-3, rtol=3e-3), \
        "mismatch vs bf16-matched reference"

    # (b) full-f32 reference of the original module semantics (with b2).
    h2_f = jnp.maximum((adj_f32 @ x) @ w1 + b1, 0.0) @ w2 + b2
    mu_f = h2_f.mean(axis=0, keepdims=True)
    var_f = ((h2_f - mu_f) ** 2).mean(axis=0, keepdims=True)
    ref_f32 = jnp.maximum(
        (h2_f - mu_f) * jax.lax.rsqrt(var_f + BN_EPS) * gamma + beta, 0.0)
    assert jnp.allclose(out, ref_f32, atol=2e-1, rtol=1e-1), \
        "mismatch vs f32 reference"

    print("KERNEL_OK")
</pallas_src>

<mosaic_0001>
module attributes {stable_mosaic.version = 11 : i64} {
  func.func @_gin_pass1_kernel(%arg0: i32, %arg1: i32, %arg2: memref<64x128xi8, #tpu.memory_space<vmem>>, %arg3: memref<128x8xbf16, #tpu.memory_space<vmem>>, %arg4: memref<8x128xbf16, #tpu.memory_space<vmem>>, %arg5: memref<1x128xf32, #tpu.memory_space<vmem>>, %arg6: memref<128x128xbf16, #tpu.memory_space<vmem>>, %arg7: memref<64x128xbf16, #tpu.memory_space<vmem>>, %arg8: memref<8x128xf32, #tpu.memory_space<vmem>>, %arg9: memref<64x8xf32, #tpu.memory_space<vmem>>) attributes {dimension_semantics = [#tpu.dimension_semantics<parallel>, #tpu.dimension_semantics<arbitrary>], iteration_bounds = array<i64: 4, 2>, scalar_prefetch = 0 : i64, scratch_operands = 1 : i64, tpu.core_type = #tpu.core_type<tc>, window_params = [{transform_indices = @transform_0, window_bounds = array<i64: 64, 128>}, {transform_indices = @transform_1, window_bounds = array<i64: 128, 8>}, {pipeline_mode = #tpu.pipeline_mode<synchronous>, transform_indices = @transform_2, window_bounds = array<i64: 8, 128>}, {pipeline_mode = #tpu.pipeline_mode<synchronous>, transform_indices = @transform_3, window_bounds = array<i64: 1, 128>}, {pipeline_mode = #tpu.pipeline_mode<synchronous>, transform_indices = @transform_4, window_bounds = array<i64: 128, 128>}, {transform_indices = @transform_5, window_bounds = array<i64: 64, 128>}, {transform_indices = @transform_6, window_bounds = array<i64: 8, 128>}]} {
    %c0_i32 = arith.constant 0 : i32
    %0 = arith.cmpi eq, %arg1, %c0_i32 : i32
    %1 = arith.extui %0 : i1 to i32
    %c0_i32_0 = arith.constant 0 : i32
    %2 = arith.cmpi ne, %1, %c0_i32_0 : i32
    scf.if %2 {
      %cst_9 = arith.constant 0.000000e+00 : f32
      %13 = vector.broadcast %cst_9 : f32 to vector<64x8xf32>
      %c0_10 = arith.constant 0 : index
      %c0_11 = arith.constant 0 : index
      %14 = vector.load %arg9[%c0_10, %c0_11] : memref<64x8xf32, #tpu.memory_space<vmem>>, vector<64x8xf32>
      tpu.vector_store %arg9[%c0_10, %c0_11], %13 {strides = array<i32>} : memref<64x8xf32, #tpu.memory_space<vmem>>, vector<64x8xf32>,
    } else {
    }
    %c0 = arith.constant 0 : index
    %c0_1 = arith.constant 0 : index
    %3 = vector.load %arg2[%c0, %c0_1] : memref<64x128xi8, #tpu.memory_space<vmem>>, vector<64x128xi8>
    %4 = arith.sitofp %3 : vector<64x128xi8> to vector<64x128xbf16>
    %c0_2 = arith.constant 0 : index
    %c0_3 = arith.constant 0 : index
    %5 = vector.load %arg9[%c0_2, %c0_3] : memref<64x8xf32, #tpu.memory_space<vmem>>, vector<64x8xf32>
    %c0_4 = arith.constant 0 : index
    %c0_5 = arith.constant 0 : index
    %6 = vector.load %arg3[%c0_4, %c0_5] : memref<128x8xbf16, #tpu.memory_space<vmem>>, vector<128x8xbf16>
    %cst = arith.constant dense<0.000000e+00> : vector<64x8xf32>
    %7 = tpu.matmul %4, %6, %cst {dimension_numbers = #tpu.dot_dimension_numbers<[1], [0], [0], [1], [0, 0, 1, 1], [], []>} : vector<64x128xbf16>, vector<128x8xbf16>, vector<64x8xf32> -> vector<64x8xf32>
    %8 = arith.addf %5, %7 : vector<64x8xf32>
    %c0_6 = arith.constant 0 : index
    %c0_7 = arith.constant 0 : index
    %9 = vector.load %arg9[%c0_6, %c0_7] : memref<64x8xf32, #tpu.memory_space<vmem>>, vector<64x8xf32>
    tpu.vector_store %arg9[%c0_6, %c0_7], %8 {strides = array<i32>} : memref<64x8xf32, #tpu.memory_space<vmem>>, vector<64x8xf32>,
    %c1_i32 = arith.constant 1 : i32
    %10 = arith.cmpi eq, %arg1, %c1_i32 : i32
    %11 = arith.extui %10 : i1 to i32
    %c0_i32_8 = arith.constant 0 : i32
    %12 = arith.cmpi ne, %11, %c0_i32_8 : i32
    scf.if %12 {
      %c0_9 = arith.constant 0 : index
      %c0_10 = arith.constant 0 : index
      %13 = vector.load %arg9[%c0_9, %c0_10] : memref<64x8xf32, #tpu.memory_space<vmem>>, vector<64x8xf32>
      %14 = arith.truncf %13 : vector<64x8xf32> to vector<64x8xbf16>
      %c0_11 = arith.constant 0 : index
      %c0_12 = arith.constant 0 : index
      %15 = vector.load %arg4[%c0_11, %c0_12] : memref<8x128xbf16, #tpu.memory_space<vmem>>, vector<8x128xbf16>
      %cst_13 = arith.constant dense<0.000000e+00> : vector<64x128xf32>
      %16 = tpu.matmul %14, %15, %cst_13 {dimension_numbers = #tpu.dot_dimension_numbers<[1], [0], [0], [1], [0, 0, 1, 1], [], []>} : vector<64x8xbf16>, vector<8x128xbf16>, vector<64x128xf32> -> vector<64x128xf32>
      %c0_14 = arith.constant 0 : index
      %c0_15 = arith.constant 0 : index
      %17 = vector.load %arg5[%c0_14, %c0_15] : memref<1x128xf32, #tpu.memory_space<vmem>>, vector<1x128xf32>
      %18 = vector.broadcast %17 : vector<1x128xf32> to vector<64x128xf32>
      %19 = arith.addf %16, %18 : vector<64x128xf32>
      %cst_16 = arith.constant 0.000000e+00 : f32
      %20 = vector.broadcast %cst_16 : f32 to vector<64x128xf32>
      %21 = arith.maximumf %19, %20 : vector<64x128xf32>
      %22 = arith.truncf %21 : vector<64x128xf32> to vector<64x128xbf16>
      %c0_17 = arith.constant 0 : index
      %c0_18 = arith.constant 0 : index
      %23 = vector.load %arg6[%c0_17, %c0_18] : memref<128x128xbf16, #tpu.memory_space<vmem>>, vector<128x128xbf16>
      %cst_19 = arith.constant dense<0.000000e+00> : vector<64x128xf32>
      %24 = tpu.matmul %22, %23, %cst_19 {dimension_numbers = #tpu.dot_dimension_numbers<[1], [0], [0], [1], [0, 0, 1, 1], [], []>} : vector<64x128xbf16>, vector<128x128xbf16>, vector<64x128xf32> -> vector<64x128xf32>
      %25 = arith.truncf %24 : vector<64x128xf32> to vector<64x128xbf16>
      %c0_20 = arith.constant 0 : index
      %c0_21 = arith.constant 0 : index
      %26 = vector.load %arg7[%c0_20, %c0_21] : memref<64x128xbf16, #tpu.memory_space<vmem>>, vector<64x128xbf16>
      tpu.vector_store %arg7[%c0_20, %c0_21], %25 {strides = array<i32>} : memref<64x128xbf16, #tpu.memory_space<vmem>>, vector<64x128xbf16>,
      %c64_i32 = arith.constant 64 : i32
      %27 = arith.muli %arg0, %c64_i32 : i32
      %28 = tpu.iota {dimensions = array<i32: 0>} : vector<64x128xi32>
      %29 = vector.broadcast %27 : i32 to vector<64x128xi32>
      %30 = arith.addi %29, %28 : vector<64x128xi32>
      %c200_i32 = arith.constant 200 : i32
      %31 = vector.broadcast %c200_i32 : i32 to vector<64x128xi32>
      %32 = arith.cmpi slt, %30, %31 : vector<64x128xi32>
      %cst_22 = arith.constant 0.000000e+00 : f32
      %33 = vector.broadcast %cst_22 : f32 to vector<64x128xf32>
      %34 = arith.select %32, %24, %33 : vector<64x128xi1>, vector<64x128xf32>
      %cst_23 = arith.constant dense<0.000000e+00> : vector<128xf32>
      %35 = vector.multi_reduction <add>, %34, %cst_23 [0] : vector<64x128xf32> to vector<128xf32>
      %36 = vector.shape_cast %35 : vector<128xf32> to vector<1x128xf32>
      %c0_24 = arith.constant 0 : index
      %c0_25 = arith.constant 0 : index
      %37 = vector.load %arg8[%c0_24, %c0_25] : memref<8x128xf32, #tpu.memory_space<vmem>>, vector<1x128xf32>
      tpu.vector_store %arg8[%c0_24, %c0_25], %36 {strides = array<i32>} : memref<8x128xf32, #tpu.memory_space<vmem>>, vector<1x128xf32>,
      %38 = arith.mulf %34, %34 : vector<64x128xf32>
      %cst_26 = arith.constant dense<0.000000e+00> : vector<128xf32>
      %39 = vector.multi_reduction <add>, %38, %cst_26 [0] : vector<64x128xf32> to vector<128xf32>
      %40 = vector.shape_cast %39 : vector<128xf32> to vector<1x128xf32>
      %c1 = arith.constant 1 : index
      %c0_27 = arith.constant 0 : index
      %41 = vector.load %arg8[%c1, %c0_27] : memref<8x128xf32, #tpu.memory_space<vmem>>, vector<1x128xf32>
      tpu.vector_store %arg8[%c1, %c0_27], %40 {strides = array<i32>} : memref<8x128xf32, #tpu.memory_space<vmem>>, vector<1x128xf32>,
    } else {
    }
    return
  }
  func.func @transform_0(%arg0: i32, %arg1: i32) -> (i32, i32) {
    %c0_i32 = arith.constant 0 : i32
    return %arg0, %arg1 : i32, i32
  }
  func.func @transform_1(%arg0: i32, %arg1: i32) -> (i32, i32) {
    %c0_i32 = arith.constant 0 : i32
    %c0_i32_0 = arith.constant 0 : i32
    return %arg1, %c0_i32 : i32, i32
  }
  func.func @transform_2(%arg0: i32, %arg1: i32) -> (i32, i32) {
    %c0_i32 = arith.constant 0 : i32
    %c0_i32_0 = arith.constant 0 : i32
    %c0_i32_1 = arith.constant 0 : i32
    return %c0_i32, %c0_i32_0 : i32, i32
  }
  func.func @transform_3(%arg0: i32, %arg1: i32) -> (i32, i32) {
    %c0_i32 = arith.constant 0 : i32
    %c0_i32_0 = arith.constant 0 : i32
    %c0_i32_1 = arith.constant 0 : i32
    return %c0_i32, %c0_i32_0 : i32, i32
  }
  func.func @transform_4(%arg0: i32, %arg1: i32) -> (i32, i32) {
    %c0_i32 = arith.constant 0 : i32
    %c0_i32_0 = arith.constant 0 : i32
    %c0_i32_1 = arith.constant 0 : i32
    return %c0_i32, %c0_i32_0 : i32, i32
  }
  func.func @transform_5(%arg0: i32, %arg1: i32) -> (i32, i32) {
    %c0_i32 = arith.constant 0 : i32
    %c0_i32_0 = arith.constant 0 : i32
    return %arg0, %c0_i32 : i32, i32
  }
  func.func @transform_6(%arg0: i32, %arg1: i32) -> (i32, i32) {
    %c0_i32 = arith.constant 0 : i32
    %c0_i32_0 = arith.constant 0 : i32
    return %arg0, %c0_i32 : i32, i32
  }
}

</mosaic_0001>

<llo_original>
// kernel: tpu_custom_call.1
$region0: #{tpu_custom_call.1}
  #allocation0 [shape = 'u32[]', space=smem, size = 0x4, offset = 0x4, fixed_abs, tag = 'smem constant byte address 0x4 - core index']
  #allocation1 [shape = 'u32[144,128]{1,0:T(1,128)}', space=vmem, size = 0x12000, scoped, tag = 'internal scratch']
  #allocation2 [shape = 'f32[64,8]{1,0:T(8,128)}', space=vmem, size = 0x8000, scoped, tag = 'scratch operand']
  %s0 = inlined_call_operand.vmem [shape: s8[256,256], index: 0, kind: input, shape index: {}]
  %s1 = inlined_call_operand.vmem [shape: bf16[256,8], index: 1, kind: input, shape index: {}]
  %s2 = inlined_call_operand.vmem [shape: bf16[8,128], index: 2, kind: input, shape index: {}]
  %s3 = inlined_call_operand.vmem [shape: f32[1,128], index: 3, kind: input, shape index: {}]
  %s4 = inlined_call_operand.hbm [shape: bf16[128,128], index: 4, kind: input, shape index: {}]
  %s5 = inlined_call_operand.hbm [shape: bf16[256,128], index: 5, kind: output, shape index: {0}]
  %s6 = inlined_call_operand.hbm [shape: f32[32,128], index: 6, kind: output, shape index: {1}]
  %7 = xla_tuple %s5, %s6
  %s8 = sld [smem:[#allocation0]]
  $region111: #{tpu_custom_call.1} parent=0
    _
  %s10 = ssub.s32 1, %s8
  %s11 = scalar_select 0, %s10, %s8
  $region1: #{tpu_custom_call.1} parent=0
    #allocation3 [shape = 'u8[16384]{0}', space=vmem, size = 0x4000, scoped, tag = 'input window, operand 0']
    #allocation4 [shape = 'u8[32768]{0}', space=vmem, size = 0x8000, scoped, tag = 'input window, operand 4, single buffered']
    #allocation5 [shape = 's32[2]{0}', space=sflag, size = 0x8, scoped, tag = 'scoped memory for tpu_custom_call.1']
    #allocation6 [shape = 's32[2]{0}', space=sflag, size = 0x8, scoped, tag = 'scoped memory for tpu_custom_call.1']
    #allocation7 [shape = 'u8[32768]{0}', space=vmem, size = 0x8000, scoped, tag = 'output window, operand 0']
    #allocation8 [shape = 'u8[8192]{0}', space=vmem, size = 0x2000, scoped, tag = 'output window, operand 1']
    #allocation9 [shape = 's32[2]{0}', space=sflag, size = 0x8, scoped, tag = 'scoped memory for tpu_custom_call.1']
    %12 = vsyncpa [#allocation5], 0
    %13 = vsyncpa [#allocation6], 0
    %s14 = scalar_lea.sflag [#allocation6], 1
    %15 = vsyncpa %s14, 0
    %16 = vsyncpa [#allocation9], 0
    %s17 = scalar_lea.sflag [#allocation9], 1
    %18 = vsyncpa %s17, 0
    loop: start=0, step=1, limit=10
    $region2: #{tpu_custom_call.1} parent=1 // loop_pre_header
      _
    $region3: #{tpu_custom_call.1} parent=1 // loop_header
      %s20 = sphi 0, %s24
      %p21 = scmp.ge.s32.totalorder %s20, 10
      %s27 = sphi 0, %s39
      %s28 = sphi 0, %s35
      %s29 = sphi 0, %s27
      %s30 = sphi 0, %s28
      %s31 = sphi 0, %s29
      %s32 = sphi 0, %s30
      %s44 = sphi 0, %s46
      %s47 = sphi 0, %s44
      %s48 = sphi 0, %s47
      %s64 = sphi 0, %s48
      %s70 = sphi 0, %s72
      %s73 = sphi 0, %s70
      %s74 = sphi 0, %s73
      %s90 = sphi 0, %s74
      %s94 = sphi 0, %s94
      %s96 = sphi 0, %s94
      %s97 = sphi 0, %s96
      %s111 = sphi 0, %s97
      %s115 = sphi 0, %s115
      %s117 = sphi 0, %s115
      %s118 = sphi 0, %s117
      %s132 = sphi 0, %s118
      %s136 = sphi 0, %s136
      %s138 = sphi 0, %s136
      %s139 = sphi 0, %s138
      %s153 = sphi 0, %s139
      %s159 = sphi 0, %s161
      %s162 = sphi 0, %s159
      %s163 = sphi 0, %s162
      %s179 = sphi 0, %s163
      %s185 = sphi 0, %s187
      %s188 = sphi 0, %s185
      %s189 = sphi 0, %s188
      %s205 = sphi 0, %s189
    $region4: #{tpu_custom_call.1} parent=1 // loop_header_branch
      %23 = sbr.rel (%p21) target = $region8
    $region5: #{tpu_custom_call.1} parent=1 // loop_body
      %s25 = ssub.s32 %s20, 1
      %s26 = ssub.s32 %s20, 2
      %s33 = sadd.s32 1, %s28
      %p34 = scmp.ge.s32.totalorder %s33, 2
      %s35 = scalar_select %p34, 0, %s33
      %s36 = sadd.s32 1, %s27
      %s37 = scalar_select %p34, %s36, %s27
      %p38 = scmp.ge.s32.totalorder %s37, 4
      %s39 = scalar_select %p38, 0, %s37
      %s40 = ssub.s32 %s27, %s39
      %s41 = ssub.s32 %s28, %s35
      %s42 = sor.u32 %s40, %s41
      %p43 = scmp.eq.s32.totalorder %s42, 0
      %s45 = sadd.s32 %s44, 1
      %s46 = scalar_select %p43, %s44, %s45
      %p49 = pneg %p43
      %p50 = scmp.eq.s32.totalorder %s20, 7
      %p51 = por %p49, %p50
      %p52 = scmp.ne.s32.totalorder %s44, %s47
      %p53 = scmp.eq.s32.totalorder %s20, 0
      %p54 = por %p52, %p53
      %p55 = scmp.ne.s32.totalorder %s44, %s47
      %p56 = scmp.eq.s32.totalorder %s25, 7
      %p57 = por %p55, %p56
      %p58 = scmp.ne.s32.totalorder %s47, %s48
      %p59 = scmp.eq.s32.totalorder %s25, 0
      %p60 = por %p58, %p59
      %p61 = scmp.ne.s32.totalorder %s47, %s48
      %p62 = scmp.eq.s32.totalorder %s26, 7
      %p63 = por %p61, %p62
      %p65 = scmp.ne.s32.totalorder %s48, %s64
      %p66 = scmp.eq.s32.totalorder %s26, 0
      %p67 = por %p65, %p66
      %s68 = ssub.s32 %s28, %s35
      %p69 = scmp.eq.s32.totalorder %s68, 0
      %s71 = sadd.s32 %s70, 1
      %s72 = scalar_select %p69, %s70, %s71
      %p75 = pneg %p69
      %p76 = scmp.eq.s32.totalorder %s20, 7
      %p77 = por %p75, %p76
      %p78 = scmp.ne.s32.totalorder %s70, %s73
      %p79 = scmp.eq.s32.totalorder %s20, 0
      %p80 = por %p78, %p79
      %p81 = scmp.ne.s32.totalorder %s70, %s73
      %p82 = scmp.eq.s32.totalorder %s25, 7
      %p83 = por %p81, %p82
      %p84 = scmp.ne.s32.totalorder %s73, %s74
      %p85 = scmp.eq.s32.totalorder %s25, 0
      %p86 = por %p84, %p85
      %p87 = scmp.ne.s32.totalorder %s73, %s74
      %p88 = scmp.eq.s32.totalorder %s26, 7
      %p89 = por %p87, %p88
      %p91 = scmp.ne.s32.totalorder %s74, %s90
      %p92 = scmp.eq.s32.totalorder %s26, 0
      %p93 = por %p91, %p92
      %s95 = sadd.s32 %s94, 1
      %p98 = scmp.eq.s32.totalorder %s20, 7
      %p99 = scmp.ne.s32.totalorder %s94, %s96
      %p100 = scmp.eq.s32.totalorder %s20, 0
      %p101 = por %p99, %p100
      %p102 = scmp.ne.s32.totalorder %s94, %s96
      %p103 = scmp.eq.s32.totalorder %s25, 7
      %p104 = por %p102, %p103
      %p105 = scmp.ne.s32.totalorder %s96, %s97
      %p106 = scmp.eq.s32.totalorder %s25, 0
      %p107 = por %p105, %p106
      %p108 = scmp.ne.s32.totalorder %s96, %s97
      %p109 = scmp.eq.s32.totalorder %s26, 7
      %p110 = por %p108, %p109
      %p112 = scmp.ne.s32.totalorder %s97, %s111
      %p113 = scmp.eq.s32.totalorder %s26, 0
      %p114 = por %p112, %p113
      %s116 = sadd.s32 %s115, 1
      %p119 = scmp.eq.s32.totalorder %s20, 7
      %p120 = scmp.ne.s32.totalorder %s115, %s117
      %p121 = scmp.eq.s32.totalorder %s20, 0
      %p122 = por %p120, %p121
      %p123 = scmp.ne.s32.totalorder %s115, %s117
      %p124 = scmp.eq.s32.totalorder %s25, 7
      %p125 = por %p123, %p124
      %p126 = scmp.ne.s32.totalorder %s117, %s118
      %p127 = scmp.eq.s32.totalorder %s25, 0
      %p128 = por %p126, %p127
      %p129 = scmp.ne.s32.totalorder %s117, %s118
      %p130 = scmp.eq.s32.totalorder %s26, 7
      %p131 = por %p129, %p130
      %p133 = scmp.ne.s32.totalorder %s118, %s132
      %p134 = scmp.eq.s32.totalorder %s26, 0
      %p135 = por %p133, %p134
      %s137 = sadd.s32 %s136, 1
      %p140 = scmp.eq.s32.totalorder %s20, 7
      %p141 = scmp.ne.s32.totalorder %s136, %s138
      %p142 = scmp.eq.s32.totalorder %s20, 0
      %p143 = por %p141, %p142
      %p144 = scmp.ne.s32.totalorder %s136, %s138
      %p145 = scmp.eq.s32.totalorder %s25, 7
      %p146 = por %p144, %p145
      %p147 = scmp.ne.s32.totalorder %s138, %s139
      %p148 = scmp.eq.s32.totalorder %s25, 0
      %p149 = por %p147, %p148
      %p150 = scmp.ne.s32.totalorder %s138, %s139
      %p151 = scmp.eq.s32.totalorder %s26, 7
      %p152 = por %p150, %p151
      %p154 = scmp.ne.s32.totalorder %s139, %s153
      %p155 = scmp.eq.s32.totalorder %s26, 0
      %p156 = por %p154, %p155
      %s157 = ssub.s32 %s27, %s39
      %p158 = scmp.eq.s32.totalorder %s157, 0
      %s160 = sadd.s32 %s159, 1
      %s161 = scalar_select %p158, %s159, %s160
      %p164 = pneg %p158
      %p165 = scmp.eq.s32.totalorder %s20, 7
      %p166 = por %p164, %p165
      %p167 = scmp.ne.s32.totalorder %s159, %s162
      %p168 = scmp.eq.s32.totalorder %s20, 0
      %p169 = por %p167, %p168
      %p170 = scmp.ne.s32.totalorder %s159, %s162
      %p171 = scmp.eq.s32.totalorder %s25, 7
      %p172 = por %p170, %p171
      %p173 = scmp.ne.s32.totalorder %s162, %s163
      %p174 = scmp.eq.s32.totalorder %s25, 0
      %p175 = por %p173, %p174
      %p176 = scmp.ne.s32.totalorder %s162, %s163
      %p177 = scmp.eq.s32.totalorder %s26, 7
      %p178 = por %p176, %p177
      %p180 = scmp.ne.s32.totalorder %s163, %s179
      %p181 = scmp.eq.s32.totalorder %s26, 0
      %p182 = por %p180, %p181
      %s183 = ssub.s32 %s27, %s39
      %p184 = scmp.eq.s32.totalorder %s183, 0
      %s186 = sadd.s32 %s185, 1
      %s187 = scalar_select %p184, %s185, %s186
      %p190 = pneg %p184
      %p191 = scmp.eq.s32.totalorder %s20, 7
      %p192 = por %p190, %p191
      %p193 = scmp.ne.s32.totalorder %s185, %s188
      %p194 = scmp.eq.s32.totalorder %s20, 0
      %p195 = por %p193, %p194
      %p196 = scmp.ne.s32.totalorder %s185, %s188
      %p197 = scmp.eq.s32.totalorder %s25, 7
      %p198 = por %p196, %p197
      %p199 = scmp.ne.s32.totalorder %s188, %s189
      %p200 = scmp.eq.s32.totalorder %s25, 0
      %p201 = por %p199, %p200
      %p202 = scmp.ne.s32.totalorder %s188, %s189
      %p203 = scmp.eq.s32.totalorder %s26, 7
      %p204 = por %p202, %p203
      %p206 = scmp.ne.s32.totalorder %s189, %s205
      %p207 = scmp.eq.s32.totalorder %s26, 0
      %p208 = por %p206, %p207
      %p209 = scmp.le.s32.totalorder 1, %s20
      %p210 = scmp.lt.s32.totalorder %s20, 9
      %p211 = pnand %p209, %p210
      %p212 = pneg %p211
      // Predicated region
      $region9: #{tpu_custom_call.1} parent=5 // pred_check
        _
      $region10: #{tpu_custom_call.1} parent=5 // pred_check_branch
        %214 = sbr.rel (%p211) target = $region12
      $region11: #{tpu_custom_call.1} parent=5 // pred_region
        %s215 = ssub.s32 %s20, 1
        // Predicated region
        $region13: #{tpu_custom_call.1} parent=11 // pred_check
          %p216 = pneg %p107
        $region14: #{tpu_custom_call.1} parent=11 // pred_check_branch
          %218 = sbr.rel (%p216) target = $region16
        $region15: #{tpu_custom_call.1} parent=11 // pred_region
          _
        $region16: #{tpu_custom_call.1} parent=11 // pred_fallthru
          _
        // Predicated region
        $region17: #{tpu_custom_call.1} parent=11 // pred_check
          %p219 = pneg %p128
        $region18: #{tpu_custom_call.1} parent=11 // pred_check_branch
          %221 = sbr.rel (%p219) target = $region20
        $region19: #{tpu_custom_call.1} parent=11 // pred_region
          _
        $region20: #{tpu_custom_call.1} parent=11 // pred_fallthru
          _
        // Predicated region
        $region21: #{tpu_custom_call.1} parent=11 // pred_check
          %p222 = pneg %p149
        $region22: #{tpu_custom_call.1} parent=11 // pred_check_branch
          %224 = sbr.rel (%p222) target = $region24
        $region23: #{tpu_custom_call.1} parent=11 // pred_region
          %s226 = ssub.s32 1024, 1024
          %227 = vsyncadd [#allocation5], %s226
          %s228 = sshll.u32 [#allocation4], 4
          %s229 = int_to_ptr.vmem [resolvable:$true] %s228
          %234 = dma.hbm_to_vmem [thread:$0]  %s4, 1024, %s229, [#allocation5], 64, 64, 4
        $region24: #{tpu_custom_call.1} parent=11 // pred_fallthru
          _
      $region12: #{tpu_custom_call.1} parent=5 // pred_fallthru
        _
      %p235 = scmp.lt.s32.totalorder %s20, 8
      // Predicated region
      $region25: #{tpu_custom_call.1} parent=5 // pred_check
        %p236 = pneg %p235
      $region26: #{tpu_custom_call.1} parent=5 // pred_check_branch
        %238 = sbr.rel (%p236) target = $region28
      $region27: #{tpu_custom_call.1} parent=5 // pred_region
        // Predicated region
        $region29: #{tpu_custom_call.1} parent=27 // pred_check
          %p239 = pneg %p54
        $region30: #{tpu_custom_call.1} parent=27 // pred_check_branch
          %241 = sbr.rel (%p239) target = $region32
        $region31: #{tpu_custom_call.1} parent=27 // pred_region
          %s242 = sand.u32 %s44, 1
          %s243 = sand.u32 %s44, 1
          %s244 = smul.addr %s243, 16
          %s245 = scalar_lea.vmem [#allocation3], %s244
          %s246 = smul.u32 2, %s27
          %s247 = smul.addr %s246, 2
          %s248 = sadd.s32 %s28, %s247
          %s249 = smul.addr %s248, 8
          %s250 = scalar_lea.vmem %s0, %s249
          // Predicated region
          $region33: #{tpu_custom_call.1} parent=31 // pred_check
            _
          $region34: #{tpu_custom_call.1} parent=31 // pred_check_branch
            %252 = sbr.rel (0) target = $region36
          $region35: #{tpu_custom_call.1} parent=31 // pred_region
            // Predicated region
            $region37: #{tpu_custom_call.1} parent=35 // pred_check
              _
            $region38: #{tpu_custom_call.1} parent=35 // pred_check_branch
              %254 = sbr.rel (0) target = $region40
            $region39: #{tpu_custom_call.1} parent=35 // pred_region
              // Predicated region
              $region52: #{tpu_custom_call.1} parent=39 // pred_check
                _
              $region53: #{tpu_custom_call.1} parent=39 // pred_check_branch
                %272 = sbr.rel (0) target = $region55
              $region54: #{tpu_custom_call.1} parent=39 // pred_region
                loop: start=0, step=1, limit=1
                $region56: #{tpu_custom_call.1} parent=54 // loop_pre_header
                  _
                $region57: #{tpu_custom_call.1} parent=54 // loop_header
                  %s274 = sphi 0, %s278
                  %p275 = scmp.ge.s32.totalorder %s274, 1
                  %s279 = sphi %s250, %s250
                  %s280 = sphi %s245, %s245
                $region58: #{tpu_custom_call.1} parent=54 // loop_header_branch
                  %277 = sbr.rel (%p275) target = $region62
                $region59: #{tpu_custom_call.1} parent=54 // loop_body
                  %v281 = vld [vmem:[%s279] sm:$0xff]
                  %282 = vst [vmem:[%s280] sm:$0xff] %v281
                  %v283 = vld [vmem:[%s279 + $0x10] sm:$0xff]
                  %284 = vst [vmem:[%s280 + $0x8] sm:$0xff] %v283
                $region60: #{tpu_custom_call.1} parent=54 // loop_footer
                  %s278 = sadd.s32 1, %s274
                $region61: #{tpu_custom_call.1} parent=54 // loop_footer_branch
                  %273 = sbr.rel target = $region57
                $region62: #{tpu_custom_call.1} parent=54 // loop_exit
                  _
              $region55: #{tpu_custom_call.1} parent=39 // pred_fallthru
                _
              // Predicated region
              $region63: #{tpu_custom_call.1} parent=39 // pred_check
                _
              $region64: #{tpu_custom_call.1} parent=39 // pred_check_branch
                %286 = sbr.rel target = $region66
              $region65: #{tpu_custom_call.1} parent=39 // pred_region
                _
              $region66: #{tpu_custom_call.1} parent=39 // pred_fallthru
                _
            $region40: #{tpu_custom_call.1} parent=35 // pred_fallthru
              _
            // Predicated region
            $region41: #{tpu_custom_call.1} parent=35 // pred_check
              _
            $region42: #{tpu_custom_call.1} parent=35 // pred_check_branch
              %256 = sbr.rel target = $region44
            $region43: #{tpu_custom_call.1} parent=35 // pred_region
              %s258 = ssub.s32 256, 1
              loop: start=0, step=1, limit=1
              $region45: #{tpu_custom_call.1} parent=43 // loop_pre_header
                _
              $region46: #{tpu_custom_call.1} parent=43 // loop_header
                %s260 = sphi 0, %s264
                %p261 = scmp.ge.s32.totalorder %s260, 1
                %s265 = sphi %s250, %s250
                %s266 = sphi %s245, %s245
              $region47: #{tpu_custom_call.1} parent=43 // loop_header_branch
                %263 = sbr.rel (%p261) target = $region51
              $region48: #{tpu_custom_call.1} parent=43 // loop_body
                %v267 = vld [vmem:[%s265] sm:%s258]
                %268 = vst [vmem:[%s266] sm:%s258] %v267
                %v269 = vld [vmem:[%s265 + $0x10] sm:%s258]
                %270 = vst [vmem:[%s266 + $0x8] sm:%s258] %v269
              $region49: #{tpu_custom_call.1} parent=43 // loop_footer
                %s264 = sadd.s32 1, %s260
              $region50: #{tpu_custom_call.1} parent=43 // loop_footer_branch
                %259 = sbr.rel target = $region46
              $region51: #{tpu_custom_call.1} parent=43 // loop_exit
                _
            $region44: #{tpu_custom_call.1} parent=35 // pred_fallthru
              _
          $region36: #{tpu_custom_call.1} parent=31 // pred_fallthru
            _
          %287 = vnop
        $region32: #{tpu_custom_call.1} parent=27 // pred_fallthru
          _
        // Predicated region
        $region67: #{tpu_custom_call.1} parent=27 // pred_check
          %p288 = pneg %p80
        $region68: #{tpu_custom_call.1} parent=27 // pred_check_branch
          %290 = sbr.rel (%p288) target = $region70
        $region69: #{tpu_custom_call.1} parent=27 // pred_region
          %s291 = smul.u32 16, %s28
          %p292 = scmp.lt.s32.totalorder %s291, 31
          %s293 = scalar_select %p292, %s291, 31
          %s294 = smul.addr %s293, 4
          %s295 = scalar_lea.vmem %s1, %s294
          %s296 = smul.u32 16, %s28
        $region70: #{tpu_custom_call.1} parent=27 // pred_fallthru
          _
      $region28: #{tpu_custom_call.1} parent=5 // pred_fallthru
        _
      %p297 = scmp.le.s32.totalorder 1, %s20
      %p298 = scmp.lt.s32.totalorder %s20, 9
      %p299 = pnand %p297, %p298
      %p300 = pneg %p299
      // Predicated region
      $region71: #{tpu_custom_call.1} parent=5 // pred_check
        _
      $region72: #{tpu_custom_call.1} parent=5 // pred_check_branch
        %302 = sbr.rel (%p299) target = $region74
      $region73: #{tpu_custom_call.1} parent=5 // pred_region
        %s303 = ssub.s32 %s20, 1
        %s304 = sand.u32 %s47, 1
        %s305 = sand.u32 %s47, 1
        %s306 = smul.addr %s305, 16
        %s307 = scalar_lea.vmem [#allocation3], %s306
        // Predicated region
        $region75: #{tpu_custom_call.1} parent=73 // pred_check
          %p308 = pneg %p60
        $region76: #{tpu_custom_call.1} parent=73 // pred_check_branch
          %310 = sbr.rel (%p308) target = $region78
        $region77: #{tpu_custom_call.1} parent=73 // pred_region
          _
        $region78: #{tpu_custom_call.1} parent=73 // pred_fallthru
          _
        // Predicated region
        $region79: #{tpu_custom_call.1} parent=73 // pred_check
          %p311 = pneg %p149
        $region80: #{tpu_custom_call.1} parent=73 // pred_check_branch
          %313 = sbr.rel (%p311) target = $region82
        $region81: #{tpu_custom_call.1} parent=73 // pred_region
          %314 = dma.done [#allocation5], 1024
        $region82: #{tpu_custom_call.1} parent=73 // pred_fallthru
          _
        %s315 = sand.u32 %s47, 1
        %s316 = sand.u32 %s47, 1
        %s317 = smul.addr %s316, 16
        %s318 = scalar_lea.vmem [#allocation3], %s317
        %p319 = pneg %p60
        %p320 = pneg %p57
        %s321 = smul.u32 16, %s30
        %p322 = scmp.lt.s32.totalorder %s321, 31
        %s323 = scalar_select %p322, %s321, 31
        %s324 = smul.addr %s323, 4
        %s325 = scalar_lea.vmem %s1, %s324
        %p326 = pneg %p86
        %p327 = pneg %p83
        %p328 = pneg %p107
        %p329 = pneg %p104
        %p330 = pneg %p128
        %p331 = pneg %p125
        %p332 = pneg %p149
        %p333 = pneg %p146
        %p334 = pneg %p175
        %p335 = pneg %p172
        %s336 = sand.u32 %s162, 1
        %s337 = scalar_lea.sflag [#allocation6], %s336
        %s338 = sand.u32 %s162, 1
        %s339 = smul.addr %s338, 32
        %s340 = scalar_lea.vmem [#allocation7], %s339
        %p341 = pneg %p201
        %p342 = pneg %p198
        %s343 = sand.u32 %s188, 1
        %s344 = scalar_lea.sflag [#allocation9], %s343
        %s345 = sand.u32 %s188, 1
        %s346 = smul.addr %s345, 8
        %s347 = scalar_lea.vmem [#allocation8], %s346
        %s348 = smul.u32 2, %s29
        %s349 = smul.u32 16, %s30
        %p350 = scmp.lt.s32.totalorder %s349, 31
        %s351 = scalar_select %p350, %s349, 31
        %s352 = smul.addr %s351, 4
        %s353 = scalar_lea.vmem %s1, %s352
        %s354 = smul.u32 16, %s30
        %s355 = smul.u32 8, %s29
        %p357 = scmp.eq.s32.totalorder %s30, 0
        // Predicated region
        $region83: #{tpu_custom_call.1} parent=73 // pred_check
          %p358 = pneg %p357
        $region84: #{tpu_custom_call.1} parent=73 // pred_check_branch
          %360 = sbr.rel (%p358) target = $region86
        $region85: #{tpu_custom_call.1} parent=73 // pred_region
          %vm361 = vcmask 64512
          %362 = vst.msk [vmem:[#allocation2] sm:$0xff] %vm361, 0.0
          %363 = vst.msk [vmem:[#allocation2 + $0x8] sm:$0xff] %vm361, 0.0
          %364 = vst.msk [vmem:[#allocation2 + $0x10] sm:$0xff] %vm361, 0.0
          %365 = vst.msk [vmem:[#allocation2 + $0x18] sm:$0xff] %vm361, 0.0
          %366 = vst.msk [vmem:[#allocation2 + $0x20] sm:$0xff] %vm361, 0.0
          %367 = vst.msk [vmem:[#allocation2 + $0x28] sm:$0xff] %vm361, 0.0
          %368 = vst.msk [vmem:[#allocation2 + $0x30] sm:$0xff] %vm361, 0.0
          %369 = vst.msk [vmem:[#allocation2 + $0x38] sm:$0xff] %vm361, 0.0
        $region86: #{tpu_custom_call.1} parent=73 // pred_fallthru
          _
        %v370 = vld [vmem:[%s307] sm:$0xff]
        %v371 = vld [vmem:[%s307 + $0x8] sm:$0xff]
        %v372 = vunpack.c.l.s8.bf16 %v370
        %v373 = vunpack.c.h.s8.bf16 %v370
        %v374 = vunpack.c.l.s8.bf16 %v371
        %v375 = vunpack.c.h.s8.bf16 %v371
        %v376 = vld [vmem:[#allocation2] sm:$0xff]
        %v377 = vld [vmem:[#allocation2 + $0x8] sm:$0xff]
        %v378 = vld [vmem:[#allocation2 + $0x10] sm:$0xff]
        %v379 = vld [vmem:[#allocation2 + $0x18] sm:$0xff]
        %v380 = vld [vmem:[#allocation2 + $0x20] sm:$0xff]
        %v381 = vld [vmem:[#allocation2 + $0x28] sm:$0xff]
        %v382 = vld [vmem:[#allocation2 + $0x30] sm:$0xff]
        %v383 = vld [vmem:[#allocation2 + $0x38] sm:$0xff]
        %v384 = vld [vmem:[%s353] sm:$0xf]
        %v385 = vld [vmem:[%s353 + $0x4] sm:$0xf]
        %v386 = vld [vmem:[%s353 + $0x8] sm:$0xf]
        %v387 = vld [vmem:[%s353 + $0xc] sm:$0xf]
        %v388 = vld [vmem:[%s353 + $0x10] sm:$0xf]
        %v389 = vld [vmem:[%s353 + $0x14] sm:$0xf]
        %v390 = vld [vmem:[%s353 + $0x18] sm:$0xf]
        %v391 = vld [vmem:[%s353 + $0x1c] sm:$0xf]
        %v392 = vld [vmem:[%s353 + $0x20] sm:$0xf]
        %v393 = vld [vmem:[%s353 + $0x24] sm:$0xf]
        %v394 = vld [vmem:[%s353 + $0x28] sm:$0xf]
        %v395 = vld [vmem:[%s353 + $0x2c] sm:$0xf]
        %v396 = vld [vmem:[%s353 + $0x30] sm:$0xf]
        %v397 = vld [vmem:[%s353 + $0x34] sm:$0xf]
        %v398 = vld [vmem:[%s353 + $0x38] sm:$0xf]
        %v399 = vld [vmem:[%s353 + $0x3c] sm:$0xf]
        %v416 = vunpack.c.l.b16 %v384
        %v417 = vunpack.c.l.b16 %v385
        %v418 = vunpack.c.l.b16 %v386
        %v419 = vunpack.c.l.b16 %v387
        %v420 = vunpack.c.l.b16 %v388
        %v421 = vunpack.c.l.b16 %v389
        %v422 = vunpack.c.l.b16 %v390
        %v423 = vunpack.c.l.b16 %v391
        %v424 = vunpack.c.l.b16 %v392
        %v425 = vunpack.c.l.b16 %v393
        %v426 = vunpack.c.l.b16 %v394
        %v427 = vunpack.c.l.b16 %v395
        %v428 = vunpack.c.l.b16 %v396
        %v429 = vunpack.c.l.b16 %v397
        %v430 = vunpack.c.l.b16 %v398
        %v431 = vunpack.c.l.b16 %v399
        %v432 = vpack.c.b16 %v417, %v416
        %v433 = vpack.c.b16 %v419, %v418
        %v434 = vpack.c.b16 %v421, %v420
        %v435 = vpack.c.b16 %v423, %v422
        %v436 = vpack.c.b16 %v425, %v424
        %v437 = vpack.c.b16 %v427, %v426
        %v438 = vpack.c.b16 %v429, %v428
        %v439 = vpack.c.b16 %v431, %v430
        %448 = vmatprep.subr.bf16.mxu0 0
        %449 = vmatpush1.bf16.msra.mxu0 %v439
        %450 = vmatprep.subr.bf16.mxu0 0
        %451 = vmatpush1.bf16.msra.mxu0 %v438
        %452 = vmatprep.subr.bf16.mxu0 0
        %453 = vmatpush1.bf16.msra.mxu0 %v437
        %454 = vmatprep.subr.bf16.mxu0 0
        %455 = vmatpush1.bf16.msra.mxu0 %v436
        %456 = vmatprep.subr.bf16.mxu0 0
        %457 = vmatpush1.bf16.msra.mxu0 %v435
        %458 = vmatprep.subr.bf16.mxu0 0
        %459 = vmatpush1.bf16.msra.mxu0 %v434
        %460 = vmatprep.subr.bf16.mxu0 0
        %461 = vmatpush1.bf16.msra.mxu0 %v433
        %462 = vmatprep.subr.bf16.mxu0 0
        %463 = vmatpush1.bf16.msra.mxu0 %v432
        %464 = vmatprep.subr.bf16.mxu0 0
        %465 = vmatpush2.bf16.msra.mxu0 0
        %466 = vmatprep.subr.bf16.mxu0 0
        %467 = vmatpush2.bf16.msra.mxu0 0
        %468 = vmatprep.subr.bf16.mxu0 0
        %469 = vmatpush2.bf16.msra.mxu0 0
        %470 = vmatprep.subr.bf16.mxu0 0
        %471 = vmatpush2.bf16.msra.mxu0 0
        %472 = vmatprep.subr.bf16.mxu0 0
        %473 = vmatpush2.bf16.msra.mxu0 0
        %474 = vmatprep.subr.bf16.mxu0 0
        %475 = vmatpush2.bf16.msra.mxu0 0
        %476 = vmatprep.subr.bf16.mxu0 0
        %477 = vmatpush2.bf16.msra.mxu0 0
        %478 = vmatprep.subr.bf16.mxu0 0
        %479 = vmatpush2.bf16.msra.mxu0 0
        %480 = vmatprep.mubr.bf16.mxu0 0
        %481 = vmatmul.mubr.bf16.gmra.mxu0 %v372
        %v482 = vpop.f32.mrf.mxu0
        %v483 = vadd.f32 0.0, %v482
        %v484 = vpop.f32.mrf.mxu0
        %v485 = vpop.f32.mrf.mxu0
        %v486 = vadd.f32 0.0, %v485
        %v487 = vpop.f32.mrf.mxu0
        %488 = vmatprep.mubr.bf16.mxu0 0
        %489 = vmatmul.mubr.bf16.gmra.mxu0 %v373
        %v490 = vpop.f32.mrf.mxu0
        %v491 = vadd.f32 0.0, %v490
        %v492 = vpop.f32.mrf.mxu0
        %v493 = vpop.f32.mrf.mxu0
        %v494 = vadd.f32 0.0, %v493
        %v495 = vpop.f32.mrf.mxu0
        %496 = vmatprep.mubr.bf16.mxu0 0
        %497 = vmatmul.mubr.bf16.gmra.mxu0 %v374
        %v498 = vpop.f32.mrf.mxu0
        %v499 = vadd.f32 0.0, %v498
        %v500 = vpop.f32.mrf.mxu0
        %v501 = vpop.f32.mrf.mxu0
        %v502 = vadd.f32 0.0, %v501
        %v503 = vpop.f32.mrf.mxu0
        %504 = vmatprep.mubr.bf16.mxu0 0
        %505 = vmatmul.mubr.bf16.gmra.mxu0 %v375
        %v506 = vpop.f32.mrf.mxu0
        %v507 = vadd.f32 0.0, %v506
        %v508 = vpop.f32.mrf.mxu0
        %v509 = vpop.f32.mrf.mxu0
        %v510 = vadd.f32 0.0, %v509
        %v511 = vpop.f32.mrf.mxu0
        %512 = vdwg.mxu0
        %v513 = vadd.f32 %v376, %v483
        %v514 = vadd.f32 %v377, %v486
        %v515 = vadd.f32 %v378, %v491
        %v516 = vadd.f32 %v379, %v494
        %v517 = vadd.f32 %v380, %v499
        %v518 = vadd.f32 %v381, %v502
        %v519 = vadd.f32 %v382, %v507
        %v520 = vadd.f32 %v383, %v510
        %vm521 = vcmask 64512
        %522 = vst.msk [vmem:[#allocation2] sm:$0xff] %vm521, %v513
        %523 = vst.msk [vmem:[#allocation2 + $0x8] sm:$0xff] %vm521, %v514
        %524 = vst.msk [vmem:[#allocation2 + $0x10] sm:$0xff] %vm521, %v515
        %525 = vst.msk [vmem:[#allocation2 + $0x18] sm:$0xff] %vm521, %v516
        %526 = vst.msk [vmem:[#allocation2 + $0x20] sm:$0xff] %vm521, %v517
        %527 = vst.msk [vmem:[#allocation2 + $0x28] sm:$0xff] %vm521, %v518
        %528 = vst.msk [vmem:[#allocation2 + $0x30] sm:$0xff] %vm521, %v519
        %529 = vst.msk [vmem:[#allocation2 + $0x38] sm:$0xff] %vm521, %v520
        %p530 = scmp.eq.s32.totalorder %s30, 1
        // Predicated region
        $region87: #{tpu_custom_call.1} parent=73 // pred_check
          %p531 = pneg %p530
        $region88: #{tpu_custom_call.1} parent=73 // pred_check_branch
          %533 = sbr.rel (%p531) target = $region90
        $region89: #{tpu_custom_call.1} parent=73 // pred_region
          %v534 = vld [vmem:[#allocation2] sm:$0xff]
          %v535 = vld [vmem:[#allocation2 + $0x8] sm:$0xff]
          %v536 = vld [vmem:[#allocation2 + $0x10] sm:$0xff]
          %v537 = vld [vmem:[#allocation2 + $0x18] sm:$0xff]
          %v538 = vld [vmem:[#allocation2 + $0x20] sm:$0xff]
          %v539 = vld [vmem:[#allocation2 + $0x28] sm:$0xff]
          %v540 = vld [vmem:[#allocation2 + $0x30] sm:$0xff]
          %v541 = vld [vmem:[#allocation2 + $0x38] sm:$0xff]
          %v542 = vpack.c.bf16 %v535, %v534
          %v543 = vpack.c.bf16 %v537, %v536
          %v544 = vpack.c.bf16 %v539, %v538
          %v545 = vpack.c.bf16 %v541, %v540
          %v546 = vld [vmem:[%s2] sm:$0xf]
          %v547 = vld [vmem:[%s3] sm:$0x1]
          %v549 = vlaneseq
          %v550 = vshrl.u32 %v549, 7
          %v551 = vsub.s32 0, %v550
          %v552 = vrot.slane %v547, %v551
          %v555 = vsel %vm521, %v542, 0
          %v558 = vsel %vm521, %v543, 0
          %v561 = vsel %vm521, %v544, 0
          %v564 = vsel %vm521, %v545, 0
          %vm566 = vcmask 1043456
          %v568 = vsel %vm566, %v546, 0
          %570 = vmatprep.subr.bf16.mxu0 0
          %571 = vmatpush1.bf16.msra.mxu0 0
          %572 = vmatprep.subr.bf16.mxu0 0
          %573 = vmatpush1.bf16.msra.mxu0 0
          %574 = vmatprep.subr.bf16.mxu0 0
          %575 = vmatpush1.bf16.msra.mxu0 0
          %576 = vmatprep.subr.bf16.mxu0 0
          %577 = vmatpush1.bf16.msra.mxu0 0
          %578 = vmatprep.subr.bf16.mxu0 0
          %579 = vmatpush1.bf16.msra.mxu0 0
          %580 = vmatprep.subr.bf16.mxu0 0
          %581 = vmatpush1.bf16.msra.mxu0 0
          %582 = vmatprep.subr.bf16.mxu0 0
          %583 = vmatpush1.bf16.msra.mxu0 0
          %584 = vmatprep.subr.bf16.mxu0 0
          %585 = vmatpush1.bf16.msra.mxu0 %v568
          %586 = vmatprep.subr.bf16.mxu0 0
          %587 = vmatpush2.bf16.msra.mxu0 0
          %588 = vmatprep.subr.bf16.mxu0 0
          %589 = vmatpush2.bf16.msra.mxu0 0
          %590 = vmatprep.subr.bf16.mxu0 0
          %591 = vmatpush2.bf16.msra.mxu0 0
          %592 = vmatprep.subr.bf16.mxu0 0
          %593 = vmatpush2.bf16.msra.mxu0 0
          %594 = vmatprep.subr.bf16.mxu0 0
          %595 = vmatpush2.bf16.msra.mxu0 0
          %596 = vmatprep.subr.bf16.mxu0 0
          %597 = vmatpush2.bf16.msra.mxu0 0
          %598 = vmatprep.subr.bf16.mxu0 0
          %599 = vmatpush2.bf16.msra.mxu0 0
          %600 = vmatprep.subr.bf16.mxu0 0
          %601 = vmatpush2.bf16.msra.mxu0 0
          %602 = vmatprep.mubr.bf16.mxu0 0
          %603 = vmatmul.mubr.bf16.gmra.mxu0 %v555
          %v604 = vpop.f32.mrf.mxu0
          %v605 = vadd.f32 %v552, %v604
          %v606 = vpop.f32.mrf.mxu0
          %v607 = vpop.f32.mrf.mxu0
          %v608 = vadd.f32 %v552, %v607
          %v609 = vpop.f32.mrf.mxu0
          %610 = vmatprep.mubr.bf16.mxu0 0
          %611 = vmatmul.mubr.bf16.gmra.mxu0 %v558
          %v612 = vpop.f32.mrf.mxu0
          %v613 = vadd.f32 %v552, %v612
          %v614 = vpop.f32.mrf.mxu0
          %v615 = vpop.f32.mrf.mxu0
          %v616 = vadd.f32 %v552, %v615
          %v617 = vpop.f32.mrf.mxu0
          %618 = vmatprep.mubr.bf16.mxu0 0
          %619 = vmatmul.mubr.bf16.gmra.mxu0 %v561
          %v620 = vpop.f32.mrf.mxu0
          %v621 = vadd.f32 %v552, %v620
          %v622 = vpop.f32.mrf.mxu0
          %v623 = vpop.f32.mrf.mxu0
          %v624 = vadd.f32 %v552, %v623
          %v625 = vpop.f32.mrf.mxu0
          %626 = vmatprep.mubr.bf16.mxu0 0
          %627 = vmatmul.mubr.bf16.gmra.mxu0 %v564
          %v628 = vpop.f32.mrf.mxu0
          %v629 = vadd.f32 %v552, %v628
          %v630 = vpop.f32.mrf.mxu0
          %v631 = vpop.f32.mrf.mxu0
          %v632 = vadd.f32 %v552, %v631
          %v633 = vpop.f32.mrf.mxu0
          %634 = vdwg.mxu0
          %v635 = vmax.f32 %v605, 0.0
          %v636 = vmax.f32 %v608, 0.0
          %v637 = vmax.f32 %v613, 0.0
          %v638 = vmax.f32 %v616, 0.0
          %v639 = vmax.f32 %v621, 0.0
          %v640 = vmax.f32 %v624, 0.0
          %v641 = vmax.f32 %v629, 0.0
          %v642 = vmax.f32 %v632, 0.0
          %v643 = vpack.c.bf16 %v636, %v635
          %v644 = vpack.c.bf16 %v638, %v637
          %v645 = vpack.c.bf16 %v640, %v639
          %v646 = vpack.c.bf16 %v642, %v641
          %v647 = vld [vmem:[#allocation4] sm:$0xf]
          %v648 = vld [vmem:[#allocation4 + $0x4] sm:$0xf]
          %v649 = vld [vmem:[#allocation4 + $0x8] sm:$0xf]
          %v650 = vld [vmem:[#allocation4 + $0xc] sm:$0xf]
          %v651 = vld [vmem:[#allocation4 + $0x10] sm:$0xf]
          %v652 = vld [vmem:[#allocation4 + $0x14] sm:$0xf]
          %v653 = vld [vmem:[#allocation4 + $0x18] sm:$0xf]
          %v654 = vld [vmem:[#allocation4 + $0x1c] sm:$0xf]
          %v655 = vld [vmem:[#allocation4 + $0x20] sm:$0xf]
          %v656 = vld [vmem:[#allocation4 + $0x24] sm:$0xf]
          %v657 = vld [vmem:[#allocation4 + $0x28] sm:$0xf]
          %v658 = vld [vmem:[#allocation4 + $0x2c] sm:$0xf]
          %v659 = vld [vmem:[#allocation4 + $0x30] sm:$0xf]
          %v660 = vld [vmem:[#allocation4 + $0x34] sm:$0xf]
          %v661 = vld [vmem:[#allocation4 + $0x38] sm:$0xf]
          %v662 = vld [vmem:[#allocation4 + $0x3c] sm:$0xf]
          %v679 = vunpack.c.l.b16 %v647
          %v680 = vunpack.c.l.b16 %v648
          %v681 = vunpack.c.l.b16 %v649
          %v682 = vunpack.c.l.b16 %v650
          %v683 = vunpack.c.l.b16 %v651
          %v684 = vunpack.c.l.b16 %v652
          %v685 = vunpack.c.l.b16 %v653
          %v686 = vunpack.c.l.b16 %v654
          %v687 = vunpack.c.l.b16 %v655
          %v688 = vunpack.c.l.b16 %v656
          %v689 = vunpack.c.l.b16 %v657
          %v690 = vunpack.c.l.b16 %v658
          %v691 = vunpack.c.l.b16 %v659
          %v692 = vunpack.c.l.b16 %v660
          %v693 = vunpack.c.l.b16 %v661
          %v694 = vunpack.c.l.b16 %v662
          %v695 = vpack.c.b16 %v680, %v679
          %v696 = vpack.c.b16 %v682, %v681
          %v697 = vpack.c.b16 %v684, %v683
          %v698 = vpack.c.b16 %v686, %v685
          %v699 = vpack.c.b16 %v688, %v687
          %v700 = vpack.c.b16 %v690, %v689
          %v701 = vpack.c.b16 %v692, %v691
          %v702 = vpack.c.b16 %v694, %v693
          %711 = vmatprep.subr.bf16.mxu0 0
          %712 = vmatpush1.bf16.msra.mxu0 %v702
          %713 = vmatprep.subr.bf16.mxu0 0
          %714 = vmatpush1.bf16.msra.mxu0 %v701
          %715 = vmatprep.subr.bf16.mxu0 0
          %716 = vmatpush1.bf16.msra.mxu0 %v700
          %717 = vmatprep.subr.bf16.mxu0 0
          %718 = vmatpush1.bf16.msra.mxu0 %v699
          %719 = vmatprep.subr.bf16.mxu0 0
          %720 = vmatpush1.bf16.msra.mxu0 %v698
          %721 = vmatprep.subr.bf16.mxu0 0
          %722 = vmatpush1.bf16.msra.mxu0 %v697
          %723 = vmatprep.subr.bf16.mxu0 0
          %724 = vmatpush1.bf16.msra.mxu0 %v696
          %725 = vmatprep.subr.bf16.mxu0 0
          %726 = vmatpush1.bf16.msra.mxu0 %v695
          %727 = vmatprep.subr.bf16.mxu0 0
          %728 = vmatpush2.bf16.msra.mxu0 0
          %729 = vmatprep.subr.bf16.mxu0 0
          %730 = vmatpush2.bf16.msra.mxu0 0
          %731 = vmatprep.subr.bf16.mxu0 0
          %732 = vmatpush2.bf16.msra.mxu0 0
          %733 = vmatprep.subr.bf16.mxu0 0
          %734 = vmatpush2.bf16.msra.mxu0 0
          %735 = vmatprep.subr.bf16.mxu0 0
          %736 = vmatpush2.bf16.msra.mxu0 0
          %737 = vmatprep.subr.bf16.mxu0 0
          %738 = vmatpush2.bf16.msra.mxu0 0
          %739 = vmatprep.subr.bf16.mxu0 0
          %740 = vmatpush2.bf16.msra.mxu0 0
          %741 = vmatprep.subr.bf16.mxu0 0
          %742 = vmatpush2.bf16.msra.mxu0 0
          %743 = vmatprep.mubr.bf16.mxu0 0
          %744 = vmatmul.mubr.bf16.gmra.mxu0 %v643
          %v745 = vpop.f32.mrf.mxu0
          %v746 = vadd.f32 0.0, %v745
          %v747 = vpop.f32.mrf.mxu0
          %v748 = vpop.f32.mrf.mxu0
          %v749 = vadd.f32 0.0, %v748
          %v750 = vpop.f32.mrf.mxu0
          %751 = vmatprep.mubr.bf16.mxu0 0
          %752 = vmatmul.mubr.bf16.gmra.mxu0 %v644
          %v753 = vpop.f32.mrf.mxu0
          %v754 = vadd.f32 0.0, %v753
          %v755 = vpop.f32.mrf.mxu0
          %v756 = vpop.f32.mrf.mxu0
          %v757 = vadd.f32 0.0, %v756
          %v758 = vpop.f32.mrf.mxu0
          %759 = vmatprep.mubr.bf16.mxu0 0
          %760 = vmatmul.mubr.bf16.gmra.mxu0 %v645
          %v761 = vpop.f32.mrf.mxu0
          %v762 = vadd.f32 0.0, %v761
          %v763 = vpop.f32.mrf.mxu0
          %v764 = vpop.f32.mrf.mxu0
          %v765 = vadd.f32 0.0, %v764
          %v766 = vpop.f32.mrf.mxu0
          %767 = vmatprep.mubr.bf16.mxu0 0
          %768 = vmatmul.mubr.bf16.gmra.mxu0 %v646
          %v769 = vpop.f32.mrf.mxu0
          %v770 = vadd.f32 0.0, %v769
          %v771 = vpop.f32.mrf.mxu0
          %v772 = vpop.f32.mrf.mxu0
          %v773 = vadd.f32 0.0, %v772
          %v774 = vpop.f32.mrf.mxu0
          %775 = vdwg.mxu0
          %v776 = vpack.c.bf16 %v749, %v746
          %v777 = vpack.c.bf16 %v757, %v754
          %v778 = vpack.c.bf16 %v765, %v762
          %v779 = vpack.c.bf16 %v773, %v770
          %v784 = vunpack.c.l.b16 %v776
          %v785 = vunpack.c.h.b16 %v776
          %v786 = vunpack.c.l.b16 %v777
          %v787 = vunpack.c.h.b16 %v777
          %v788 = vunpack.c.l.b16 %v778
          %v789 = vunpack.c.h.b16 %v778
          %v790 = vunpack.c.l.b16 %v779
          %v791 = vunpack.c.h.b16 %v779
          %v792 = vpack.c.b16 %v784, %v784
          %v793 = vpack.c.b16 %v785, %v785
          %v794 = vpack.c.b16 %v786, %v786
          %v795 = vpack.c.b16 %v787, %v787
          %v796 = vpack.c.b16 %v788, %v788
          %v797 = vpack.c.b16 %v789, %v789
          %v798 = vpack.c.b16 %v790, %v790
          %v799 = vpack.c.b16 %v791, %v791
          %808 = vst [vmem:[%s340] sm:$0xf] %v792
          %809 = vst [vmem:[%s340 + $0x4] sm:$0xf] %v793
          %810 = vst [vmem:[%s340 + $0x8] sm:$0xf] %v794
          %811 = vst [vmem:[%s340 + $0xc] sm:$0xf] %v795
          %812 = vst [vmem:[%s340 + $0x10] sm:$0xf] %v796
          %813 = vst [vmem:[%s340 + $0x14] sm:$0xf] %v797
          %814 = vst [vmem:[%s340 + $0x18] sm:$0xf] %v798
          %815 = vst [vmem:[%s340 + $0x1c] sm:$0xf] %v799
          %s816 = smul.u32 %s29, 64
          %v817 = vlaneseq
          %v818 = vshrl.u32 %v817, 7
          %v819 = vadd.s32 %v818, 8
          %v820 = vadd.s32 %v818, 16
          %v821 = vadd.s32 %v818, 24
          %v822 = vadd.s32 %v818, 32
          %v823 = vadd.s32 %v818, 40
          %v824 = vadd.s32 %v818, 48
          %v825 = vadd.s32 %v818, 56
          %v826 = vstv %s816
          %v827 = vadd.s32 %v826, %v818
          %v828 = vadd.s32 %v826, %v819
          %v829 = vadd.s32 %v826, %v820
          %v830 = vadd.s32 %v826, %v821
          %v831 = vadd.s32 %v826, %v822
          %v832 = vadd.s32 %v826, %v823
          %v833 = vadd.s32 %v826, %v824
          %v834 = vadd.s32 %v826, %v825
          %vm835 = vcmp.lt.s32.totalorder %v827, 200
          %vm836 = vcmp.lt.s32.totalorder %v828, 200
          %vm837 = vcmp.lt.s32.totalorder %v829, 200
          %vm838 = vcmp.lt.s32.totalorder %v830, 200
          %vm839 = vcmp.lt.s32.totalorder %v831, 200
          %vm840 = vcmp.lt.s32.totalorder %v832, 200
          %vm841 = vcmp.lt.s32.totalorder %v833, 200
          %vm842 = vcmp.lt.s32.totalorder %v834, 200
          %v843 = vsel %vm835, %v746, 0.0
          %v844 = vsel %vm836, %v749, 0.0
          %v845 = vsel %vm837, %v754, 0.0
          %v846 = vsel %vm838, %v757, 0.0
          %v847 = vsel %vm839, %v762, 0.0
          %v848 = vsel %vm840, %v765, 0.0
          %v849 = vsel %vm841, %v770, 0.0
          %v850 = vsel %vm842, %v773, 0.0
          %v851 = vadd.f32 %v843, %v844
          %v852 = vadd.f32 %v851, %v845
          %v853 = vadd.f32 %v852, %v846
          %v854 = vadd.f32 %v853, %v847
          %v855 = vadd.f32 %v854, %v848
          %v856 = vadd.f32 %v855, %v849
          %v857 = vadd.f32 %v856, %v850
          %v858 = vrot.slane %v857, 4
          %v859 = vadd.f32 %v857, %v858
          %v860 = vrot.slane %v859, 2
          %v861 = vadd.f32 %v859, %v860
          %v862 = vrot.slane %v861, 1
          %v863 = vadd.f32 %v861, %v862
          %864 = vst [vmem:[%s347] sm:$0x1] %v863
          %v865 = vmul.f32 %v843, %v843
          %v866 = vmul.f32 %v844, %v844
          %v867 = vmul.f32 %v845, %v845
          %v868 = vmul.f32 %v846, %v846
          %v869 = vmul.f32 %v847, %v847
          %v870 = vmul.f32 %v848, %v848
          %v871 = vmul.f32 %v849, %v849
          %v872 = vmul.f32 %v850, %v850
          %v873 = vadd.f32 %v865, %v866
          %v874 = vadd.f32 %v873, %v867
          %v875 = vadd.f32 %v874, %v868
          %v876 = vadd.f32 %v875, %v869
          %v877 = vadd.f32 %v876, %v870
          %v878 = vadd.f32 %v877, %v871
          %v879 = vadd.f32 %v878, %v872
          %v880 = vrot.slane %v879, 4
          %v881 = vadd.f32 %v879, %v880
          %v882 = vrot.slane %v881, 2
          %v883 = vadd.f32 %v881, %v882
          %v884 = vrot.slane %v883, 1
          %v885 = vadd.f32 %v883, %v884
          %886 = vst [vmem:[%s347 + $0x1] sm:$0x1] %v885
        $region90: #{tpu_custom_call.1} parent=73 // pred_fallthru
          _
        %s887 = sand.u32 %s162, 1
        %s888 = scalar_lea.sflag [#allocation6], %s887
        %s889 = sand.u32 %s162, 1
        %s890 = smul.addr %s889, 32
        %s891 = scalar_lea.vmem [#allocation7], %s890
        %s892 = sand.u32 %s188, 1
        %s893 = scalar_lea.sflag [#allocation9], %s892
        %s894 = sand.u32 %s188, 1
        %s895 = smul.addr %s894, 8
        %s896 = scalar_lea.vmem [#allocation8], %s895
        // Predicated region
        $region91: #{tpu_custom_call.1} parent=73 // pred_check
          %p897 = pneg %p172
        $region92: #{tpu_custom_call.1} parent=73 // pred_check_branch
          %899 = sbr.rel (%p897) target = $region94
        $region93: #{tpu_custom_call.1} parent=73 // pred_region
          %s900 = smul.u32 8, %s29
          %s902 = ssub.s32 512, 512
          %903 = vsyncadd %s888, %s902
          %s904 = smul.addr %s900, 64
          %s905 = scalar_lea.hbm %s5, %s904
          %s906 = sshll.u32 %s891, 4
          %s907 = int_to_ptr.vmem [resolvable:$true] %s906
          %912 = dma.vmem_to_hbm [thread:$0]  %s907, 512, %s905, %s888, 64, 64, 4
        $region94: #{tpu_custom_call.1} parent=73 // pred_fallthru
          _
        // Predicated region
        $region95: #{tpu_custom_call.1} parent=73 // pred_check
          %p913 = pneg %p198
        $region96: #{tpu_custom_call.1} parent=73 // pred_check_branch
          %915 = sbr.rel (%p913) target = $region98
        $region97: #{tpu_custom_call.1} parent=73 // pred_region
          %s917 = ssub.s32 128, 128
          %918 = vsyncadd %s893, %s917
          %s919 = smul.addr %s29, 128
          %s920 = scalar_lea.hbm %s6, %s919
          %s922 = sshll.u32 %s896, 4
          %s923 = int_to_ptr.vmem [resolvable:$true] %s922
          %925 = dma.vmem_to_hbm [thread:$0]  %s923, 128, %s920, %s893
        $region98: #{tpu_custom_call.1} parent=73 // pred_fallthru
          _
      $region74: #{tpu_custom_call.1} parent=5 // pred_fallthru
        _
      %p926 = scmp.le.s32.totalorder 2, %s20
      // Predicated region
      $region99: #{tpu_custom_call.1} parent=5 // pred_check
        %p927 = pneg %p926
      $region100: #{tpu_custom_call.1} parent=5 // pred_check_branch
        %929 = sbr.rel (%p927) target = $region102
      $region101: #{tpu_custom_call.1} parent=5 // pred_region
        %s930 = ssub.s32 %s20, 2
        // Predicated region
        $region103: #{tpu_custom_call.1} parent=101 // pred_check
          %p931 = pneg %p178
        $region104: #{tpu_custom_call.1} parent=101 // pred_check_branch
          %933 = sbr.rel (%p931) target = $region106
        $region105: #{tpu_custom_call.1} parent=101 // pred_region
          %s934 = sand.u32 %s163, 1
          %s935 = scalar_lea.sflag [#allocation6], %s934
          %s936 = sand.u32 %s163, 1
          %s937 = smul.addr %s936, 32
          %s938 = scalar_lea.vmem [#allocation7], %s937
          %939 = dma.done %s935, 512
        $region106: #{tpu_custom_call.1} parent=101 // pred_fallthru
          _
        // Predicated region
        $region107: #{tpu_custom_call.1} parent=101 // pred_check
          %p940 = pneg %p204
        $region108: #{tpu_custom_call.1} parent=101 // pred_check_branch
          %942 = sbr.rel (%p940) target = $region110
        $region109: #{tpu_custom_call.1} parent=101 // pred_region
          %s943 = sand.u32 %s189, 1
          %s944 = scalar_lea.sflag [#allocation9], %s943
          %s945 = sand.u32 %s189, 1
          %s946 = smul.addr %s945, 8
          %s947 = scalar_lea.vmem [#allocation8], %s946
          %948 = dma.done %s944, 128
        $region110: #{tpu_custom_call.1} parent=101 // pred_fallthru
          _
      $region102: #{tpu_custom_call.1} parent=5 // pred_fallthru
        _
    $region6: #{tpu_custom_call.1} parent=1 // loop_footer
      %s24 = sadd.s32 1, %s20
    $region7: #{tpu_custom_call.1} parent=1 // loop_footer_branch
      %19 = sbr.rel target = $region3
    $region8: #{tpu_custom_call.1} parent=1 // loop_exit
      _
    %949 = vsyncpa [#allocation5], 1
    %s950 = scalar_lea.sflag [#allocation5], 1
    %951 = vsyncpa %s950, 1
    %952 = vsyncpa [#allocation6], 1
    %s953 = scalar_lea.sflag [#allocation6], 1
    %954 = vsyncpa %s953, 1
    %955 = vsyncpa [#allocation9], 1
    %s956 = scalar_lea.sflag [#allocation9], 1
    %957 = vsyncpa %s956, 1

</llo_original>
